<compile_context>
chip_gen: v7x
topology: tpu7x:2x2x1
jax: 0.10.0
libtpu: 0.0.40
codegen_flags: <defaults>
</compile_context>

<pallas_src>
from functools import partial

import jax
import jax.numpy as jnp
from jax.experimental import pallas as pl
from jax.experimental.pallas import tpu as pltpu


def _patch_embed_kernel(x_ref, w_ref, b_ref, pos_ref, o_ref):
    # x_ref: (tile_n, K) patch rows; w_ref: (K, E); b_ref: (1, E); pos_ref: (tile_n, E).
    acc = jnp.dot(x_ref[...], w_ref[...], preferred_element_type=jnp.float32)
    acc = acc + b_ref[...].astype(jnp.float32) + pos_ref[...].astype(jnp.float32)
    # Dropout: identity in eval mode.
    o_ref[...] = acc.astype(o_ref.dtype)


def _extract_patches(x, p):
    """(B, C, D, H, W) -> (B, n_patches, C*p^3).

    Patch order is (d, h, w) row-major; within-patch order is (C, pd, ph, pw) --
    exactly matching Conv3d weight flattening + flatten(2) + transpose(-1, -2).
    """
    B, C, D, H, W = x.shape
    x = x.reshape(B, C, D // p, p, H // p, p, W // p, p)
    x = x.transpose(0, 2, 4, 6, 1, 3, 5, 7)            # (B, d, h, w, C, pd, ph, pw)
    return x.reshape(B, (D // p) * (H // p) * (W // p), C * p * p * p)


def _pick_tile_n(n_patches, K, E, itemsize):
    """Largest patch-row tile that divides n_patches and fits comfortably in VMEM."""
    budget = 24 * 2**20                                 # headroom under default scope
    if n_patches <= 512:
        return n_patches
    for cand in (512, 256, 128, 64, 32, 16, 8):
        if n_patches % cand == 0:
            foot = (2 * cand * K * itemsize             # patch tiles (double-buffered)
                    + 2 * K * E * itemsize              # weight (double-buffered)
                    + 2 * cand * E * itemsize           # pos tiles
                    + 2 * cand * E * itemsize           # output tiles
                    + cand * E * 4)                     # f32 accumulator
            if foot <= budget:
                return cand
    return 8 if n_patches % 8 == 0 else n_patches


@partial(jax.jit, static_argnames=("patch_size", "tile_n"))
def patch_embedding_pallas(x, w_conv, b_conv, pos, *, patch_size, tile_n=None):
    """x: (B, C, D, H, W); w_conv: (E, C, p, p, p); b_conv: (E,); pos: (1, n_patches, E)."""
    B, C, D, H, W = x.shape
    p = patch_size
    assert D % p == 0 and H % p == 0 and W % p == 0
    E = w_conv.shape[0]
    n_patches = (D // p) * (H // p) * (W // p)
    K = C * p * p * p
    assert pos.shape == (1, n_patches, E)

    patches = _extract_patches(x, p)                    # (B, n_patches, K)
    w2d = w_conv.reshape(E, K).T                        # (K, E) -- same flatten order
    b2d = b_conv.reshape(1, E)

    itemsize = x.dtype.itemsize
    if tile_n is None:
        tile_n = _pick_tile_n(n_patches, K, E, itemsize)
    assert n_patches % tile_n == 0

    # Double-buffered VMEM footprint (+ f32 accumulator), with 1.5x headroom,
    # capped at 64 MiB (v7x physical VMEM).
    vmem_bytes = (2 * tile_n * K * itemsize
                  + 2 * K * E * w2d.dtype.itemsize
                  + 2 * E * b2d.dtype.itemsize
                  + 2 * tile_n * E * pos.dtype.itemsize
                  + 2 * tile_n * E * itemsize
                  + tile_n * E * 4)
    vmem_limit = int(min(64 * 2**20, max(32 * 2**20, (3 * vmem_bytes) // 2)))

    M = B * n_patches
    cost = pl.CostEstimate(
        flops=2 * M * K * E,
        transcendentals=0,
        bytes_accessed=int((patches.size + w2d.size + b2d.size
                            + pos.size + M * E) * itemsize))

    grid_spec = pltpu.PrefetchScalarGridSpec(
        num_scalar_prefetch=0,
        grid=(B, n_patches // tile_n),
        in_specs=[
            pl.BlockSpec((None, tile_n, K), lambda b, i: (b, i, 0)),   # patch rows
            pl.BlockSpec((K, E), lambda b, i: (0, 0)),                 # projection W
            pl.BlockSpec((1, E), lambda b, i: (0, 0)),                 # conv bias
            pl.BlockSpec((None, tile_n, E), lambda b, i: (0, i, 0)),   # pos embed
        ],
        out_specs=pl.BlockSpec((None, tile_n, E), lambda b, i: (b, i, 0)),
    )

    return pl.pallas_call(
        _patch_embed_kernel,
        out_shape=jax.ShapeDtypeStruct((B, n_patches, E), x.dtype),
        grid_spec=grid_spec,
        compiler_params=pltpu.CompilerParams(
            dimension_semantics=("parallel", "parallel"),
            vmem_limit_bytes=vmem_limit),
        cost_estimate=cost,
    )(patches, w2d, b2d, pos)


def patch_embedding_ref(x, w_conv, b_conv, pos, *, patch_size):
    """Pure-JAX reference mirroring the PyTorch forward."""
    p = patch_size
    out = jax.lax.conv_general_dilated(
        x, w_conv, window_strides=(p, p, p), padding="VALID",
        dimension_numbers=("NCDHW", "OIDHW", "NCDHW"))
    out = out + b_conv.reshape(1, -1, 1, 1, 1)
    B, E = out.shape[0], out.shape[1]
    out = out.reshape(B, E, -1)
    out = jnp.swapaxes(out, 1, 2)                       # (B, n_patches, E)
    return out + pos


if __name__ == "__main__":
    B, C = 2, 4
    D = H = W = 16
    p = 4                                               # patch_size
    E = 128                                             # embed_dim
    n_patches = (D // p) * (H // p) * (W // p)          # 64

    key = jax.random.PRNGKey(0)
    kx, kw, kb, kp = jax.random.split(key, 4)
    x = jax.random.normal(kx, (B, C, D, H, W), jnp.float32)
    w_conv = jax.random.normal(kw, (E, C, p, p, p), jnp.float32) * 0.05
    b_conv = jax.random.normal(kb, (E,), jnp.float32) * 0.5
    pos = jax.random.normal(kp, (1, n_patches, E), jnp.float32) * 0.5

    out = patch_embedding_pallas(x, w_conv, b_conv, pos, patch_size=p)
    out = jax.block_until_ready(out)

    ref = patch_embedding_ref(x, w_conv, b_conv, pos, patch_size=p)
    assert out.shape == (B, n_patches, E)
    # Tolerance covers the differing f32 accumulation paths (XLA conv vs MXU GEMM);
    # semantic bugs would produce O(0.1-1) errors.
    assert jnp.allclose(out, ref, atol=1e-2, rtol=1e-2), \
        float(jnp.max(jnp.abs(out - ref)))
    print("KERNEL_OK")
</pallas_src>

<mosaic_0001>
module attributes {stable_mosaic.version = 11 : i64} {
  func.func @_patch_embed_kernel(%arg0: i32, %arg1: i32, %arg2: memref<1x64x256xf32, #tpu.memory_space<vmem>>, %arg3: memref<256x128xf32, #tpu.memory_space<vmem>>, %arg4: memref<1x128xf32, #tpu.memory_space<vmem>>, %arg5: memref<1x64x128xf32, #tpu.memory_space<vmem>>, %arg6: memref<1x64x128xf32, #tpu.memory_space<vmem>>) attributes {dimension_semantics = [#tpu.dimension_semantics<parallel>, #tpu.dimension_semantics<parallel>], iteration_bounds = array<i64: 2, 1>, scalar_prefetch = 0 : i64, scratch_operands = 0 : i64, tpu.core_type = #tpu.core_type<tc>, window_params = [{transform_indices = @transform_0, window_bounds = array<i64: 1, 64, 256>}, {pipeline_mode = #tpu.pipeline_mode<synchronous>, transform_indices = @transform_1, window_bounds = array<i64: 256, 128>}, {pipeline_mode = #tpu.pipeline_mode<synchronous>, transform_indices = @transform_2, window_bounds = array<i64: 1, 128>}, {transform_indices = @transform_3, window_bounds = array<i64: 1, 64, 128>}, {transform_indices = @transform_4, window_bounds = array<i64: 1, 64, 128>}]} {
    %c0 = arith.constant 0 : index
    %c0_0 = arith.constant 0 : index
    %c0_1 = arith.constant 0 : index
    %0 = vector.load %arg2[%c0, %c0_0, %c0_1] : memref<1x64x256xf32, #tpu.memory_space<vmem>>, vector<1x64x256xf32>
    %1 = vector.shape_cast %0 : vector<1x64x256xf32> to vector<64x256xf32>
    %c0_2 = arith.constant 0 : index
    %c0_3 = arith.constant 0 : index
    %2 = vector.load %arg3[%c0_2, %c0_3] : memref<256x128xf32, #tpu.memory_space<vmem>>, vector<256x128xf32>
    %cst = arith.constant dense<0.000000e+00> : vector<64x128xf32>
    %3 = tpu.matmul %1, %2, %cst {dimension_numbers = #tpu.dot_dimension_numbers<[1], [0], [0], [1], [0, 0, 1, 1], [], []>} : vector<64x256xf32>, vector<256x128xf32>, vector<64x128xf32> -> vector<64x128xf32>
    %c0_4 = arith.constant 0 : index
    %c0_5 = arith.constant 0 : index
    %4 = vector.load %arg4[%c0_4, %c0_5] : memref<1x128xf32, #tpu.memory_space<vmem>>, vector<1x128xf32>
    %5 = vector.broadcast %4 : vector<1x128xf32> to vector<64x128xf32>
    %6 = arith.addf %3, %5 : vector<64x128xf32>
    %c0_6 = arith.constant 0 : index
    %c0_7 = arith.constant 0 : index
    %c0_8 = arith.constant 0 : index
    %7 = vector.load %arg5[%c0_6, %c0_7, %c0_8] : memref<1x64x128xf32, #tpu.memory_space<vmem>>, vector<1x64x128xf32>
    %8 = vector.shape_cast %7 : vector<1x64x128xf32> to vector<64x128xf32>
    %9 = arith.addf %6, %8 : vector<64x128xf32>
    %c0_9 = arith.constant 0 : index
    %c0_10 = arith.constant 0 : index
    %c0_11 = arith.constant 0 : index
    %10 = vector.load %arg6[%c0_9, %c0_10, %c0_11] : memref<1x64x128xf32, #tpu.memory_space<vmem>>, vector<1x64x128xf32>
    %11 = vector.shape_cast %10 : vector<1x64x128xf32> to vector<64x128xf32>
    %12 = vector.shape_cast %9 : vector<64x128xf32> to vector<1x64x128xf32>
    tpu.vector_store %arg6[%c0_9, %c0_10, %c0_11], %12 {strides = array<i32>} : memref<1x64x128xf32, #tpu.memory_space<vmem>>, vector<1x64x128xf32>,
    return
  }
  func.func @transform_0(%arg0: i32, %arg1: i32) -> (i32, i32, i32) {
    %c0_i32 = arith.constant 0 : i32
    %c0_i32_0 = arith.constant 0 : i32
    return %arg0, %arg1, %c0_i32 : i32, i32, i32
  }
  func.func @transform_1(%arg0: i32, %arg1: i32) -> (i32, i32) {
    %c0_i32 = arith.constant 0 : i32
    %c0_i32_0 = arith.constant 0 : i32
    %c0_i32_1 = arith.constant 0 : i32
    return %c0_i32, %c0_i32_0 : i32, i32
  }
  func.func @transform_2(%arg0: i32, %arg1: i32) -> (i32, i32) {
    %c0_i32 = arith.constant 0 : i32
    %c0_i32_0 = arith.constant 0 : i32
    %c0_i32_1 = arith.constant 0 : i32
    return %c0_i32, %c0_i32_0 : i32, i32
  }
  func.func @transform_3(%arg0: i32, %arg1: i32) -> (i32, i32, i32) {
    %c0_i32 = arith.constant 0 : i32
    %c0_i32_0 = arith.constant 0 : i32
    %c0_i32_1 = arith.constant 0 : i32
    return %c0_i32, %arg1, %c0_i32_0 : i32, i32, i32
  }
  func.func @transform_4(%arg0: i32, %arg1: i32) -> (i32, i32, i32) {
    %c0_i32 = arith.constant 0 : i32
    %c0_i32_0 = arith.constant 0 : i32
    return %arg0, %arg1, %c0_i32 : i32, i32, i32
  }
}

</mosaic_0001>

<llo_original>
// kernel: patch_embedding_pallas.1
$region0: #{patch_embedding_pallas.1}
  #allocation0 [shape = 'u32[]', space=smem, size = 0x4, offset = 0x4, fixed_abs, tag = 'smem constant byte address 0x4 - core index']
  #allocation1 [shape = 'u32[144,128]{1,0:T(1,128)}', space=vmem, size = 0x12000, scoped, tag = 'internal scratch']
  %s0 = inlined_call_operand.vmem [shape: f32[2,64,256], index: 0, kind: input, shape index: {}]
  %s1 = inlined_call_operand.vmem [shape: f32[256,128], index: 1, kind: input, shape index: {}]
  %s2 = inlined_call_operand.vmem [shape: f32[1,128], index: 2, kind: input, shape index: {}]
  %s3 = inlined_call_operand.vmem [shape: f32[1,64,128], index: 3, kind: input, shape index: {}]
  %s4 = inlined_call_operand.hbm [shape: f32[2,64,128], index: 4, kind: output, shape index: {}]
  %s5 = sld [smem:[#allocation0]]
  $region49: #{patch_embedding_pallas.1} parent=0
    _
  %s7 = ssub.s32 1, %s5
  %s8 = scalar_select 0, %s7, %s5
  $region1: #{patch_embedding_pallas.1} parent=0
    #allocation2 [shape = 'u8[65536]{0}', space=vmem, size = 0x10000, scoped, tag = 'output window, operand 0']
    #allocation3 [shape = 's32[2]{0}', space=sflag, size = 0x8, scoped, tag = 'scoped memory for patch_embedding_pallas.1']
    %9 = vsyncpa [#allocation3], 0
    %s10 = scalar_lea.sflag [#allocation3], 1
    %11 = vsyncpa %s10, 0
    loop: start=0, step=1, limit=4
    $region2: #{patch_embedding_pallas.1} parent=1 // loop_pre_header
      _
    $region3: #{patch_embedding_pallas.1} parent=1 // loop_header
      %s13 = sphi 0, %s17
      %p14 = scmp.ge.s32.totalorder %s13, 4
      %s20 = sphi 0, %s32
      %s21 = sphi 0, %s28
      %s22 = sphi 0, %s20
      %s23 = sphi 0, %s21
      %s24 = sphi 0, %s22
      %s25 = sphi 0, %s23
      %s37 = sphi 0, %s39
      %s40 = sphi 0, %s37
      %s41 = sphi 0, %s40
      %s57 = sphi 0, %s41
      %s61 = sphi 0, %s61
      %s63 = sphi 0, %s61
      %s64 = sphi 0, %s63
      %s78 = sphi 0, %s64
      %s82 = sphi 0, %s82
      %s84 = sphi 0, %s82
      %s85 = sphi 0, %s84
      %s99 = sphi 0, %s85
      %s105 = sphi 0, %s107
      %s108 = sphi 0, %s105
      %s109 = sphi 0, %s108
      %s125 = sphi 0, %s109
      %s133 = sphi 0, %s135
      %s136 = sphi 0, %s133
      %s137 = sphi 0, %s136
      %s153 = sphi 0, %s137
    $region4: #{patch_embedding_pallas.1} parent=1 // loop_header_branch
      %16 = sbr.rel (%p14) target = $region8
    $region5: #{patch_embedding_pallas.1} parent=1 // loop_body
      %s18 = ssub.s32 %s13, 1
      %s19 = ssub.s32 %s13, 2
      %s26 = sadd.s32 1, %s21
      %p27 = scmp.ge.s32.totalorder %s26, 1
      %s28 = scalar_select %p27, 0, %s26
      %s29 = sadd.s32 1, %s20
      %s30 = scalar_select %p27, %s29, %s20
      %p31 = scmp.ge.s32.totalorder %s30, 2
      %s32 = scalar_select %p31, 0, %s30
      %s33 = ssub.s32 %s20, %s32
      %s34 = ssub.s32 %s21, %s28
      %s35 = sor.u32 %s33, %s34
      %p36 = scmp.eq.s32.totalorder %s35, 0
      %s38 = sadd.s32 %s37, 1
      %s39 = scalar_select %p36, %s37, %s38
      %p42 = pneg %p36
      %p43 = scmp.eq.s32.totalorder %s13, 1
      %p44 = por %p42, %p43
      %p45 = scmp.ne.s32.totalorder %s37, %s40
      %p46 = scmp.eq.s32.totalorder %s13, 0
      %p47 = por %p45, %p46
      %p48 = scmp.ne.s32.totalorder %s37, %s40
      %p49 = scmp.eq.s32.totalorder %s18, 1
      %p50 = por %p48, %p49
      %p51 = scmp.ne.s32.totalorder %s40, %s41
      %p52 = scmp.eq.s32.totalorder %s18, 0
      %p53 = por %p51, %p52
      %p54 = scmp.ne.s32.totalorder %s40, %s41
      %p55 = scmp.eq.s32.totalorder %s19, 1
      %p56 = por %p54, %p55
      %p58 = scmp.ne.s32.totalorder %s41, %s57
      %p59 = scmp.eq.s32.totalorder %s19, 0
      %p60 = por %p58, %p59
      %s62 = sadd.s32 %s61, 1
      %p65 = scmp.eq.s32.totalorder %s13, 1
      %p66 = scmp.ne.s32.totalorder %s61, %s63
      %p67 = scmp.eq.s32.totalorder %s13, 0
      %p68 = por %p66, %p67
      %p69 = scmp.ne.s32.totalorder %s61, %s63
      %p70 = scmp.eq.s32.totalorder %s18, 1
      %p71 = por %p69, %p70
      %p72 = scmp.ne.s32.totalorder %s63, %s64
      %p73 = scmp.eq.s32.totalorder %s18, 0
      %p74 = por %p72, %p73
      %p75 = scmp.ne.s32.totalorder %s63, %s64
      %p76 = scmp.eq.s32.totalorder %s19, 1
      %p77 = por %p75, %p76
      %p79 = scmp.ne.s32.totalorder %s64, %s78
      %p80 = scmp.eq.s32.totalorder %s19, 0
      %p81 = por %p79, %p80
      %s83 = sadd.s32 %s82, 1
      %p86 = scmp.eq.s32.totalorder %s13, 1
      %p87 = scmp.ne.s32.totalorder %s82, %s84
      %p88 = scmp.eq.s32.totalorder %s13, 0
      %p89 = por %p87, %p88
      %p90 = scmp.ne.s32.totalorder %s82, %s84
      %p91 = scmp.eq.s32.totalorder %s18, 1
      %p92 = por %p90, %p91
      %p93 = scmp.ne.s32.totalorder %s84, %s85
      %p94 = scmp.eq.s32.totalorder %s18, 0
      %p95 = por %p93, %p94
      %p96 = scmp.ne.s32.totalorder %s84, %s85
      %p97 = scmp.eq.s32.totalorder %s19, 1
      %p98 = por %p96, %p97
      %p100 = scmp.ne.s32.totalorder %s85, %s99
      %p101 = scmp.eq.s32.totalorder %s19, 0
      %p102 = por %p100, %p101
      %s103 = ssub.s32 %s21, %s28
      %p104 = scmp.eq.s32.totalorder %s103, 0
      %s106 = sadd.s32 %s105, 1
      %s107 = scalar_select %p104, %s105, %s106
      %p110 = pneg %p104
      %p111 = scmp.eq.s32.totalorder %s13, 1
      %p112 = por %p110, %p111
      %p113 = scmp.ne.s32.totalorder %s105, %s108
      %p114 = scmp.eq.s32.totalorder %s13, 0
      %p115 = por %p113, %p114
      %p116 = scmp.ne.s32.totalorder %s105, %s108
      %p117 = scmp.eq.s32.totalorder %s18, 1
      %p118 = por %p116, %p117
      %p119 = scmp.ne.s32.totalorder %s108, %s109
      %p120 = scmp.eq.s32.totalorder %s18, 0
      %p121 = por %p119, %p120
      %p122 = scmp.ne.s32.totalorder %s108, %s109
      %p123 = scmp.eq.s32.totalorder %s19, 1
      %p124 = por %p122, %p123
      %p126 = scmp.ne.s32.totalorder %s109, %s125
      %p127 = scmp.eq.s32.totalorder %s19, 0
      %p128 = por %p126, %p127
      %s129 = ssub.s32 %s20, %s32
      %s130 = ssub.s32 %s21, %s28
      %s131 = sor.u32 %s129, %s130
      %p132 = scmp.eq.s32.totalorder %s131, 0
      %s134 = sadd.s32 %s133, 1
      %s135 = scalar_select %p132, %s133, %s134
      %p138 = pneg %p132
      %p139 = scmp.eq.s32.totalorder %s13, 1
      %p140 = por %p138, %p139
      %p141 = scmp.ne.s32.totalorder %s133, %s136
      %p142 = scmp.eq.s32.totalorder %s13, 0
      %p143 = por %p141, %p142
      %p144 = scmp.ne.s32.totalorder %s133, %s136
      %p145 = scmp.eq.s32.totalorder %s18, 1
      %p146 = por %p144, %p145
      %p147 = scmp.ne.s32.totalorder %s136, %s137
      %p148 = scmp.eq.s32.totalorder %s18, 0
      %p149 = por %p147, %p148
      %p150 = scmp.ne.s32.totalorder %s136, %s137
      %p151 = scmp.eq.s32.totalorder %s19, 1
      %p152 = por %p150, %p151
      %p154 = scmp.ne.s32.totalorder %s137, %s153
      %p155 = scmp.eq.s32.totalorder %s19, 0
      %p156 = por %p154, %p155
      %p157 = scmp.le.s32.totalorder 1, %s13
      %p158 = scmp.lt.s32.totalorder %s13, 3
      %p159 = pnand %p157, %p158
      %p160 = pneg %p159
      // Predicated region
      $region9: #{patch_embedding_pallas.1} parent=5 // pred_check
        _
      $region10: #{patch_embedding_pallas.1} parent=5 // pred_check_branch
        %162 = sbr.rel (%p159) target = $region12
      $region11: #{patch_embedding_pallas.1} parent=5 // pred_region
        %s163 = ssub.s32 %s13, 1
        // Predicated region
        $region13: #{patch_embedding_pallas.1} parent=11 // pred_check
          %p164 = pneg %p74
        $region14: #{patch_embedding_pallas.1} parent=11 // pred_check_branch
          %166 = sbr.rel (%p164) target = $region16
        $region15: #{patch_embedding_pallas.1} parent=11 // pred_region
          _
        $region16: #{patch_embedding_pallas.1} parent=11 // pred_fallthru
          _
        // Predicated region
        $region17: #{patch_embedding_pallas.1} parent=11 // pred_check
          %p167 = pneg %p95
        $region18: #{patch_embedding_pallas.1} parent=11 // pred_check_branch
          %169 = sbr.rel (%p167) target = $region20
        $region19: #{patch_embedding_pallas.1} parent=11 // pred_region
          _
        $region20: #{patch_embedding_pallas.1} parent=11 // pred_fallthru
          _
        // Predicated region
        $region21: #{patch_embedding_pallas.1} parent=11 // pred_check
          %p170 = pneg %p121
        $region22: #{patch_embedding_pallas.1} parent=11 // pred_check_branch
          %172 = sbr.rel (%p170) target = $region24
        $region23: #{patch_embedding_pallas.1} parent=11 // pred_region
          %s173 = smul.u32 8, %s23
          %p174 = scmp.lt.s32.totalorder %s173, 7
          %s175 = scalar_select %p174, %s173, 7
          %s176 = smul.addr %s175, 8
          %s177 = scalar_lea.vmem %s3, %s176
          %s178 = smul.u32 8, %s23
        $region24: #{patch_embedding_pallas.1} parent=11 // pred_fallthru
          _
      $region12: #{patch_embedding_pallas.1} parent=5 // pred_fallthru
        _
      %p179 = scmp.lt.s32.totalorder %s13, 2
      // Predicated region
      $region25: #{patch_embedding_pallas.1} parent=5 // pred_check
        %p180 = pneg %p179
      $region26: #{patch_embedding_pallas.1} parent=5 // pred_check_branch
        %182 = sbr.rel (%p180) target = $region28
      $region27: #{patch_embedding_pallas.1} parent=5 // pred_region
        // Predicated region
        $region29: #{patch_embedding_pallas.1} parent=27 // pred_check
          %p183 = pneg %p47
        $region30: #{patch_embedding_pallas.1} parent=27 // pred_check_branch
          %185 = sbr.rel (%p183) target = $region32
        $region31: #{patch_embedding_pallas.1} parent=27 // pred_region
          %s186 = smul.u32 8, %s21
          %p187 = scmp.lt.s32.totalorder %s20, 1
          %s188 = scalar_select %p187, %s20, 1
          %p189 = scmp.lt.s32.totalorder %s186, 7
          %s190 = scalar_select %p189, %s186, 7
          %s191 = smul.addr %s190, 2
          %s192 = smul.addr %s188, 16
          %s193 = sadd.s32 %s191, %s192
          %s194 = smul.addr %s193, 8
          %s195 = scalar_lea.vmem %s0, %s194
          %s196 = smul.u32 8, %s21
        $region32: #{patch_embedding_pallas.1} parent=27 // pred_fallthru
          _
      $region28: #{patch_embedding_pallas.1} parent=5 // pred_fallthru
        _
      %p197 = scmp.le.s32.totalorder 1, %s13
      %p198 = scmp.lt.s32.totalorder %s13, 3
      %p199 = pnand %p197, %p198
      %p200 = pneg %p199
      // Predicated region
      $region33: #{patch_embedding_pallas.1} parent=5 // pred_check
        _
      $region34: #{patch_embedding_pallas.1} parent=5 // pred_check_branch
        %202 = sbr.rel (%p199) target = $region36
      $region35: #{patch_embedding_pallas.1} parent=5 // pred_region
        %s203 = ssub.s32 %s13, 1
        %s204 = smul.u32 8, %s23
        %p205 = scmp.lt.s32.totalorder %s22, 1
        %s206 = scalar_select %p205, %s22, 1
        %p207 = scmp.lt.s32.totalorder %s204, 7
        %s208 = scalar_select %p207, %s204, 7
        %s209 = smul.addr %s208, 2
        %s210 = smul.addr %s206, 16
        %s211 = sadd.s32 %s209, %s210
        %s212 = smul.addr %s211, 8
        %s213 = scalar_lea.vmem %s0, %s212
        %p214 = pneg %p53
        %p215 = pneg %p50
        %p216 = pneg %p74
        %p217 = pneg %p71
        %p218 = pneg %p95
        %p219 = pneg %p92
        %s220 = smul.u32 8, %s23
        %p221 = scmp.lt.s32.totalorder %s220, 7
        %s222 = scalar_select %p221, %s220, 7
        %s223 = smul.addr %s222, 8
        %s224 = scalar_lea.vmem %s3, %s223
        %p225 = pneg %p121
        %p226 = pneg %p118
        %p227 = pneg %p149
        %p228 = pneg %p146
        %s229 = sand.u32 %s136, 1
        %s230 = scalar_lea.sflag [#allocation3], %s229
        %s231 = sand.u32 %s136, 1
        %s232 = smul.addr %s231, 64
        %s233 = scalar_lea.vmem [#allocation2], %s232
        %s234 = smul.u32 8, %s23
        %p235 = scmp.lt.s32.totalorder %s22, 1
        %s236 = scalar_select %p235, %s22, 1
        %p237 = scmp.lt.s32.totalorder %s234, 7
        %s238 = scalar_select %p237, %s234, 7
        %s239 = smul.addr %s238, 2
        %s240 = smul.addr %s236, 16
        %s241 = sadd.s32 %s239, %s240
        %s242 = smul.addr %s241, 8
        %s243 = scalar_lea.vmem %s0, %s242
        %s244 = smul.u32 8, %s23
        %s245 = smul.u32 8, %s23
        %p246 = scmp.lt.s32.totalorder %s245, 7
        %s247 = scalar_select %p246, %s245, 7
        %s248 = smul.addr %s247, 8
        %s249 = scalar_lea.vmem %s3, %s248
        %s250 = smul.u32 8, %s23
        %s251 = smul.u32 8, %s23
        %v252 = vld [vmem:[%s243] sm:$0xff]
        %v253 = vld [vmem:[%s243 + $0x8] sm:$0xff]
        %v254 = vld [vmem:[%s243 + $0x10] sm:$0xff]
        %v255 = vld [vmem:[%s243 + $0x18] sm:$0xff]
        %v256 = vld [vmem:[%s243 + $0x20] sm:$0xff]
        %v257 = vld [vmem:[%s243 + $0x28] sm:$0xff]
        %v258 = vld [vmem:[%s243 + $0x30] sm:$0xff]
        %v259 = vld [vmem:[%s243 + $0x38] sm:$0xff]
        %v260 = vld [vmem:[%s243 + $0x40] sm:$0xff]
        %v261 = vld [vmem:[%s243 + $0x48] sm:$0xff]
        %v262 = vld [vmem:[%s243 + $0x50] sm:$0xff]
        %v263 = vld [vmem:[%s243 + $0x58] sm:$0xff]
        %v264 = vld [vmem:[%s243 + $0x60] sm:$0xff]
        %v265 = vld [vmem:[%s243 + $0x68] sm:$0xff]
        %v266 = vld [vmem:[%s243 + $0x70] sm:$0xff]
        %v267 = vld [vmem:[%s243 + $0x78] sm:$0xff]
        %v268 = vld [vmem:[%s1] sm:$0xff]
        %v269 = vld [vmem:[%s1 + $0x8] sm:$0xff]
        %v270 = vld [vmem:[%s1 + $0x10] sm:$0xff]
        %v271 = vld [vmem:[%s1 + $0x18] sm:$0xff]
        %v272 = vld [vmem:[%s1 + $0x20] sm:$0xff]
        %v273 = vld [vmem:[%s1 + $0x28] sm:$0xff]
        %v274 = vld [vmem:[%s1 + $0x30] sm:$0xff]
        %v275 = vld [vmem:[%s1 + $0x38] sm:$0xff]
        %v276 = vld [vmem:[%s1 + $0x40] sm:$0xff]
        %v277 = vld [vmem:[%s1 + $0x48] sm:$0xff]
        %v278 = vld [vmem:[%s1 + $0x50] sm:$0xff]
        %v279 = vld [vmem:[%s1 + $0x58] sm:$0xff]
        %v280 = vld [vmem:[%s1 + $0x60] sm:$0xff]
        %v281 = vld [vmem:[%s1 + $0x68] sm:$0xff]
        %v282 = vld [vmem:[%s1 + $0x70] sm:$0xff]
        %v283 = vld [vmem:[%s1 + $0x78] sm:$0xff]
        %v284 = vld [vmem:[%s1 + $0x80] sm:$0xff]
        %v285 = vld [vmem:[%s1 + $0x88] sm:$0xff]
        %v286 = vld [vmem:[%s1 + $0x90] sm:$0xff]
        %v287 = vld [vmem:[%s1 + $0x98] sm:$0xff]
        %v288 = vld [vmem:[%s1 + $0xa0] sm:$0xff]
        %v289 = vld [vmem:[%s1 + $0xa8] sm:$0xff]
        %v290 = vld [vmem:[%s1 + $0xb0] sm:$0xff]
        %v291 = vld [vmem:[%s1 + $0xb8] sm:$0xff]
        %v292 = vld [vmem:[%s1 + $0xc0] sm:$0xff]
        %v293 = vld [vmem:[%s1 + $0xc8] sm:$0xff]
        %v294 = vld [vmem:[%s1 + $0xd0] sm:$0xff]
        %v295 = vld [vmem:[%s1 + $0xd8] sm:$0xff]
        %v296 = vld [vmem:[%s1 + $0xe0] sm:$0xff]
        %v297 = vld [vmem:[%s1 + $0xe8] sm:$0xff]
        %v298 = vld [vmem:[%s1 + $0xf0] sm:$0xff]
        %v299 = vld [vmem:[%s1 + $0xf8] sm:$0xff]
        %v300 = vld [vmem:[%s2] sm:$0x1]
        %v302 = vlaneseq
        %v303 = vshrl.u32 %v302, 7
        %v304 = vsub.s32 0, %v303
        %v305 = vrot.slane %v300, %v304
        %307 = vmatprep.subr.mxu0 0.0
        %308 = vmatpush1.msra.mxu0 %v268
        %309 = vmatprep.subr.mxu0 0.0
        %310 = vmatpush1.msra.mxu0 %v269
        %311 = vmatprep.subr.mxu0 0.0
        %312 = vmatpush1.msra.mxu0 %v270
        %313 = vmatprep.subr.mxu0 0.0
        %314 = vmatpush1.msra.mxu0 %v271
        %315 = vmatprep.subr.mxu0 0.0
        %316 = vmatpush1.msra.mxu0 %v272
        %317 = vmatprep.subr.mxu0 0.0
        %318 = vmatpush1.msra.mxu0 %v273
        %319 = vmatprep.subr.mxu0 0.0
        %320 = vmatpush1.msra.mxu0 %v274
        %321 = vmatprep.subr.mxu0 0.0
        %322 = vmatpush1.msra.mxu0 %v275
        %323 = vmatprep.subr.mxu0 0.0
        %324 = vmatpush1.msra.mxu0 %v276
        %325 = vmatprep.subr.mxu0 0.0
        %326 = vmatpush1.msra.mxu0 %v277
        %327 = vmatprep.subr.mxu0 0.0
        %328 = vmatpush1.msra.mxu0 %v278
        %329 = vmatprep.subr.mxu0 0.0
        %330 = vmatpush1.msra.mxu0 %v279
        %331 = vmatprep.subr.mxu0 0.0
        %332 = vmatpush1.msra.mxu0 %v280
        %333 = vmatprep.subr.mxu0 0.0
        %334 = vmatpush1.msra.mxu0 %v281
        %335 = vmatprep.subr.mxu0 0.0
        %336 = vmatpush1.msra.mxu0 %v282
        %337 = vmatprep.subr.mxu0 0.0
        %338 = vmatpush1.msra.mxu0 %v283
        %339 = vmatprep.subr.mxu0 0.0
        %340 = vmatpush1.msra.mxu0 %v284
        %341 = vmatprep.subr.mxu0 0.0
        %342 = vmatpush1.msra.mxu0 %v285
        %343 = vmatprep.subr.mxu0 0.0
        %344 = vmatpush1.msra.mxu0 %v286
        %345 = vmatprep.subr.mxu0 0.0
        %346 = vmatpush1.msra.mxu0 %v287
        %347 = vmatprep.subr.mxu0 0.0
        %348 = vmatpush1.msra.mxu0 %v288
        %349 = vmatprep.subr.mxu0 0.0
        %350 = vmatpush1.msra.mxu0 %v289
        %351 = vmatprep.subr.mxu0 0.0
        %352 = vmatpush1.msra.mxu0 %v290
        %353 = vmatprep.subr.mxu0 0.0
        %354 = vmatpush1.msra.mxu0 %v291
        %355 = vmatprep.subr.mxu0 0.0
        %356 = vmatpush1.msra.mxu0 %v292
        %357 = vmatprep.subr.mxu0 0.0
        %358 = vmatpush1.msra.mxu0 %v293
        %359 = vmatprep.subr.mxu0 0.0
        %360 = vmatpush1.msra.mxu0 %v294
        %361 = vmatprep.subr.mxu0 0.0
        %362 = vmatpush1.msra.mxu0 %v295
        %363 = vmatprep.subr.mxu0 0.0
        %364 = vmatpush1.msra.mxu0 %v296
        %365 = vmatprep.subr.mxu0 0.0
        %366 = vmatpush1.msra.mxu0 %v297
        %367 = vmatprep.subr.mxu0 0.0
        %368 = vmatpush1.msra.mxu0 %v298
        %369 = vmatprep.subr.mxu0 0.0
        %370 = vmatpush1.msra.mxu0 %v299
        %371 = vmatprep.mubr.f32.mxu0 %v253
        %372 = vmatmul.mubr.f32.gmra.mrb[0].mxu0 %v252
        %v373 = vpop.f32.mrb[0].mxu0
        %v374 = vadd.f32 %v305, %v373
        %v375 = vpop.f32.mrb[0].mxu0
        %376 = vmatprep.mubr.f32.mxu0 %v255
        %377 = vmatmul.mubr.f32.gmra.mrb[0].mxu0 %v254
        %v378 = vpop.f32.mrb[0].mxu0
        %v379 = vadd.f32 %v305, %v378
        %v380 = vpop.f32.mrb[0].mxu0
        %381 = vmatprep.mubr.f32.mxu0 %v257
        %382 = vmatmul.mubr.f32.gmra.mrb[0].mxu0 %v256
        %v383 = vpop.f32.mrb[0].mxu0
        %v384 = vadd.f32 %v305, %v383
        %v385 = vpop.f32.mrb[0].mxu0
        %386 = vmatprep.mubr.f32.mxu0 %v259
        %387 = vmatmul.mubr.f32.gmra.mrb[0].mxu0 %v258
        %v388 = vpop.f32.mrb[0].mxu0
        %v389 = vadd.f32 %v305, %v388
        %v390 = vpop.f32.mrb[0].mxu0
        %391 = vmatprep.mubr.f32.mxu0 %v261
        %392 = vmatmul.mubr.f32.gmra.mrb[0].mxu0 %v260
        %v393 = vpop.f32.mrb[0].mxu0
        %v394 = vadd.f32 %v305, %v393
        %v395 = vpop.f32.mrb[0].mxu0
        %396 = vmatprep.mubr.f32.mxu0 %v263
        %397 = vmatmul.mubr.f32.gmra.mrb[0].mxu0 %v262
        %v398 = vpop.f32.mrb[0].mxu0
        %v399 = vadd.f32 %v305, %v398
        %v400 = vpop.f32.mrb[0].mxu0
        %401 = vmatprep.mubr.f32.mxu0 %v265
        %402 = vmatmul.mubr.f32.gmra.mrb[0].mxu0 %v264
        %v403 = vpop.f32.mrb[0].mxu0
        %v404 = vadd.f32 %v305, %v403
        %v405 = vpop.f32.mrb[0].mxu0
        %406 = vmatprep.mubr.f32.mxu0 %v267
        %407 = vmatmul.mubr.f32.gmra.mrb[0].mxu0 %v266
        %v408 = vpop.f32.mrb[0].mxu0
        %v409 = vadd.f32 %v305, %v408
        %v410 = vpop.f32.mrb[0].mxu0
        %411 = vdwg.mxu0
        %v412 = vld [vmem:[%s249] sm:$0xff]
        %v413 = vld [vmem:[%s249 + $0x8] sm:$0xff]
        %v414 = vld [vmem:[%s249 + $0x10] sm:$0xff]
        %v415 = vld [vmem:[%s249 + $0x18] sm:$0xff]
        %v416 = vld [vmem:[%s249 + $0x20] sm:$0xff]
        %v417 = vld [vmem:[%s249 + $0x28] sm:$0xff]
        %v418 = vld [vmem:[%s249 + $0x30] sm:$0xff]
        %v419 = vld [vmem:[%s249 + $0x38] sm:$0xff]
        %v420 = vadd.f32 %v374, %v412
        %v421 = vadd.f32 %v379, %v413
        %v422 = vadd.f32 %v384, %v414
        %v423 = vadd.f32 %v389, %v415
        %v424 = vadd.f32 %v394, %v416
        %v425 = vadd.f32 %v399, %v417
        %v426 = vadd.f32 %v404, %v418
        %v427 = vadd.f32 %v409, %v419
        %428 = vst [vmem:[%s233] sm:$0xff] %v420
        %429 = vst [vmem:[%s233 + $0x8] sm:$0xff] %v421
        %430 = vst [vmem:[%s233 + $0x10] sm:$0xff] %v422
        %431 = vst [vmem:[%s233 + $0x18] sm:$0xff] %v423
        %432 = vst [vmem:[%s233 + $0x20] sm:$0xff] %v424
        %433 = vst [vmem:[%s233 + $0x28] sm:$0xff] %v425
        %434 = vst [vmem:[%s233 + $0x30] sm:$0xff] %v426
        %435 = vst [vmem:[%s233 + $0x38] sm:$0xff] %v427
        %s436 = sand.u32 %s136, 1
        %s437 = scalar_lea.sflag [#allocation3], %s436
        %s438 = sand.u32 %s136, 1
        %s439 = smul.addr %s438, 64
        %s440 = scalar_lea.vmem [#allocation2], %s439
        // Predicated region
        $region37: #{patch_embedding_pallas.1} parent=35 // pred_check
          %p441 = pneg %p146
        $region38: #{patch_embedding_pallas.1} parent=35 // pred_check_branch
          %443 = sbr.rel (%p441) target = $region40
        $region39: #{patch_embedding_pallas.1} parent=35 // pred_region
          %s444 = smul.u32 8, %s23
          %s446 = ssub.s32 1024, 1024
          %447 = vsyncadd %s437, %s446
          %s448 = smul.addr %s22, 8
          %s449 = sadd.s32 %s444, %s448
          %s450 = smul.addr %s449, 128
          %s451 = scalar_lea.hbm %s4, %s450
          %s452 = sshll.u32 %s440, 4
          %s453 = int_to_ptr.vmem [resolvable:$true] %s452
          %458 = dma.vmem_to_hbm [thread:$0]  %s453, 1024, %s451, %s437, 128, 128, 8
        $region40: #{patch_embedding_pallas.1} parent=35 // pred_fallthru
          _
      $region36: #{patch_embedding_pallas.1} parent=5 // pred_fallthru
        _
      %p459 = scmp.le.s32.totalorder 2, %s13
      // Predicated region
      $region41: #{patch_embedding_pallas.1} parent=5 // pred_check
        %p460 = pneg %p459
      $region42: #{patch_embedding_pallas.1} parent=5 // pred_check_branch
        %462 = sbr.rel (%p460) target = $region44
      $region43: #{patch_embedding_pallas.1} parent=5 // pred_region
        %s463 = ssub.s32 %s13, 2
        // Predicated region
        $region45: #{patch_embedding_pallas.1} parent=43 // pred_check
          %p464 = pneg %p152
        $region46: #{patch_embedding_pallas.1} parent=43 // pred_check_branch
          %466 = sbr.rel (%p464) target = $region48
        $region47: #{patch_embedding_pallas.1} parent=43 // pred_region
          %s467 = sand.u32 %s137, 1
          %s468 = scalar_lea.sflag [#allocation3], %s467
          %s469 = sand.u32 %s137, 1
          %s470 = smul.addr %s469, 64
          %s471 = scalar_lea.vmem [#allocation2], %s470
          %472 = dma.done %s468, 1024
        $region48: #{patch_embedding_pallas.1} parent=43 // pred_fallthru
          _
      $region44: #{patch_embedding_pallas.1} parent=5 // pred_fallthru
        _
    $region6: #{patch_embedding_pallas.1} parent=1 // loop_footer
      %s17 = sadd.s32 1, %s13
    $region7: #{patch_embedding_pallas.1} parent=1 // loop_footer_branch
      %12 = sbr.rel target = $region3
    $region8: #{patch_embedding_pallas.1} parent=1 // loop_exit
      _
    %473 = vsyncpa [#allocation3], 1
    %s474 = scalar_lea.sflag [#allocation3], 1
    %475 = vsyncpa %s474, 1

</llo_original>
